<compile_context>
chip_gen: v6e
topology: v6e:2x2x1
jax: 0.10.0
libtpu: 0.0.40
codegen_flags: <defaults>
</compile_context>

<pallas_src>
import functools

import jax
import jax.numpy as jnp
from jax.experimental import pallas as pl
from jax.experimental.pallas import tpu as pltpu


# ----------------------------------------------------------------------------
# forward(): the torch module just returns the parameter. No kernel needed.
# ----------------------------------------------------------------------------
def estimate_adj_forward(estimated_adj):
    # Pure pass-through (a copy kernel would only burn HBM bandwidth).
    return estimated_adj


def _round_up_128(x):
    return pl.cdiv(x, 128) * 128


# ----------------------------------------------------------------------------
# Pass 1: per-row sums of A (and per-column partial sums if symmetric).
#   grid = (row_tiles, col_tiles); col tiles (reduction axis) innermost.
#   rowsum accumulates directly into the resident (tr,1) output block.
# ----------------------------------------------------------------------------
def _rowsum_colsum_kernel(a_ref, *out_refs, n, tr, tc, symmetric,
                          mask_rows, mask_cols):
    if symmetric:
        rowsum_ref, colsum_ref = out_refs
    else:
        (rowsum_ref,) = out_refs

    i = pl.program_id(0)
    k = pl.program_id(1)

    a = a_ref[...].astype(jnp.float32)
    # Edge-tile masking (only generated when n is not tile-aligned).
    if mask_cols:
        col_ids = k * tc + jax.lax.broadcasted_iota(jnp.int32, a.shape, 1)
        a = jnp.where(col_ids < n, a, 0.0)
    if mask_rows:
        row_ids = i * tr + jax.lax.broadcasted_iota(jnp.int32, a.shape, 0)
        a = jnp.where(row_ids < n, a, 0.0)

    @pl.when(k == 0)
    def _():
        rowsum_ref[...] = jnp.zeros_like(rowsum_ref)

    rowsum_ref[...] += jnp.sum(a, axis=1, keepdims=True)

    if symmetric:
        # Per-tile column-sum partial; summed over the row-tile axis in the
        # wrapper (tiny O(nt*n) op), so the row axis stays "parallel".
        colsum_ref[...] = jnp.sum(a, axis=0).reshape(1, 1, -1)


# ----------------------------------------------------------------------------
# Pass 2: out = r_row * (adj_sym + I) * r_col   (elementwise, fully parallel)
# ----------------------------------------------------------------------------
def _scale_kernel(*refs, symmetric, tr, tc):
    if symmetric:
        a_ref, at_ref, rrow_ref, rcol_ref, out_ref = refs
    else:
        a_ref, rrow_ref, rcol_ref, out_ref = refs

    a = a_ref[...].astype(jnp.float32)
    if symmetric:
        # at_ref holds the (tc, tr) block of A at the swapped position; only
        # this small block is transposed (XLU work hidden under the DMA).
        a = 0.5 * (a + at_ref[...].astype(jnp.float32).T)

    rr = rrow_ref[...]            # (tr, 1)  row scaling, VPU broadcast
    rc = rcol_ref[...]            # (1, tc)  col scaling, VPU broadcast
    out_ref[...] = (rr * a * rc).astype(out_ref.dtype)

    i = pl.program_id(0)
    j = pl.program_id(1)
    # Add the identity contribution only on tiles intersecting the diagonal:
    # [i*tr,(i+1)*tr) x [j*tc,(j+1)*tc) overlaps {r == c}.
    @pl.when((i * tr < (j + 1) * tc) & (j * tc < (i + 1) * tr))
    def _():
        row_ids = i * tr + jax.lax.broadcasted_iota(jnp.int32, (tr, tc), 0)
        col_ids = j * tc + jax.lax.broadcasted_iota(jnp.int32, (tr, tc), 1)
        eye = jnp.where(row_ids == col_ids, jnp.float32(1.0), jnp.float32(0.0))
        out_ref[...] = out_ref[...] + (rr * eye * rc).astype(out_ref.dtype)


# ----------------------------------------------------------------------------
# Wrapper: normalize()
# ----------------------------------------------------------------------------
def estimate_adj_normalize(estimated_adj, symmetric=False,
                           tiles=(512, 2048, 512, 1024)):
    """tiles = (pass1_rows, pass1_cols, pass2_rows, pass2_cols).

    Defaults are sized for v5e/v6e/v7x: pass-1 blocks are large along the
    reduction axis (4 MiB DMA per step); pass-2 symmetric working set is
    ~12 MiB double-buffered (fits v7x's 64 MiB/TC VMEM).
    """
    n = estimated_adj.shape[0]
    a = estimated_adj                       # native dtype; kernels upcast

    n128 = _round_up_128(n)
    tr1, tc1, tr2, tc2 = (min(_round_up_128(t), n128) for t in tiles)

    nt_r1, nt_c1 = pl.cdiv(n, tr1), pl.cdiv(n, tc1)
    nt_r2, nt_c2 = pl.cdiv(n, tr2), pl.cdiv(n, tc2)

    vmem_limit = 48 << 20                   # safe on all of v5e/v6e/v7x
    itemsize = jnp.dtype(a.dtype).itemsize

    mask_cols = (n % tc1) != 0
    mask_rows = symmetric and ((n % tr1) != 0)

    # ---------------- pass 1: rowsum (+ colsum partials if symmetric) -------
    if symmetric:
        out_shape1 = (jax.ShapeDtypeStruct((n, 1), jnp.float32),
                      jax.ShapeDtypeStruct((nt_r1, 1, n), jnp.float32))
        out_specs1 = (pl.BlockSpec((tr1, 1), lambda i, k: (i, 0)),
                      pl.BlockSpec((1, 1, tc1), lambda i, k: (i, 0, k)))
    else:
        out_shape1 = jax.ShapeDtypeStruct((n, 1), jnp.float32)
        out_specs1 = pl.BlockSpec((tr1, 1), lambda i, k: (i, 0))

    pass1 = pl.pallas_call(
        functools.partial(_rowsum_colsum_kernel, n=n, tr=tr1, tc=tc1,
                          symmetric=symmetric,
                          mask_rows=mask_rows, mask_cols=mask_cols),
        out_shape=out_shape1,
        grid_spec=pltpu.PrefetchScalarGridSpec(
            num_scalar_prefetch=0,
            grid=(nt_r1, nt_c1),                 # reduction (cols) innermost
            in_specs=[pl.BlockSpec((tr1, tc1), lambda i, k: (i, k))],
            out_specs=out_specs1,
        ),
        compiler_params=pltpu.CompilerParams(
            dimension_semantics=("parallel", "arbitrary"),
            vmem_limit_bytes=vmem_limit),
        cost_estimate=pl.CostEstimate(
            flops=(2 if symmetric else 1) * n * n,
            transcendentals=0,
            bytes_accessed=n * n * itemsize + (nt_r1 * n + n) * 4),
    )
    res1 = pass1(a)
    if symmetric:
        rowsum, colsum_parts = res1
    else:
        rowsum = res1

    # Tiny O(n) combine + rsqrt in plain JAX (negligible vs n^2 kernel traffic).
    rowsum = rowsum.reshape(n)
    if symmetric:
        colsum = colsum_parts.reshape(nt_r1, n).sum(axis=0)
        degree = 0.5 * (rowsum + colsum) + 1.0    # rowsum((A+A.T)/2 + I)
    else:
        degree = rowsum + 1.0                     # rowsum(A + I)
    r = jax.lax.rsqrt(degree)                     # same NaN/inf semantics as **-0.5
    r_inv = jnp.where(jnp.isinf(r), 0.0, r)
    r_row = r_inv.reshape(n, 1)                   # sublane-major row scale
    r_col = r_inv.reshape(1, n)                   # lane-major column scale

    # ---------------- pass 2: elementwise scale ------------------------------
    in_specs2 = [pl.BlockSpec((tr2, tc2), lambda i, j: (i, j))]
    inputs2 = [a]
    if symmetric:
        # Transposed block of A fetched via swapped index_map; shape (tc2, tr2).
        in_specs2.append(pl.BlockSpec((tc2, tr2), lambda i, j: (j, i)))
        inputs2.append(a)
    in_specs2 += [
        pl.BlockSpec((tr2, 1), lambda i, j: (i, 0)),
        pl.BlockSpec((1, tc2), lambda i, j: (0, j)),
    ]
    inputs2 += [r_row, r_col]

    out = pl.pallas_call(
        functools.partial(_scale_kernel, symmetric=symmetric, tr=tr2, tc=tc2),
        out_shape=jax.ShapeDtypeStruct((n, n), jnp.float32),
        grid_spec=pltpu.PrefetchScalarGridSpec(
            num_scalar_prefetch=0,
            grid=(nt_r2, nt_c2),
            in_specs=in_specs2,
            out_specs=pl.BlockSpec((tr2, tc2), lambda i, j: (i, j)),
        ),
        compiler_params=pltpu.CompilerParams(
            dimension_semantics=("parallel", "parallel"),
            vmem_limit_bytes=vmem_limit),
        cost_estimate=pl.CostEstimate(
            flops=(4 if symmetric else 2) * n * n,
            transcendentals=0,
            bytes_accessed=((2 if symmetric else 1) * n * n * itemsize
                            + n * n * 4 + 2 * n * 4)),
    )(*inputs2)
    return out


# ----------------------------------------------------------------------------
# Pure-JAX reference for verification
# ----------------------------------------------------------------------------
def _normalize_ref(adj, symmetric=False):
    a = adj.astype(jnp.float32)
    if symmetric:
        a = (a + a.T) / 2.0
    n = a.shape[0]
    mx = a + jnp.eye(n, dtype=a.dtype)
    rowsum = mx.sum(1)
    r_inv = rowsum ** -0.5
    r_inv = jnp.where(jnp.isinf(r_inv), 0.0, r_inv)
    r_mat = jnp.diag(r_inv)
    return r_mat @ mx @ r_mat


if __name__ == "__main__":
    key_a, key_b = jax.random.split(jax.random.PRNGKey(0))

    # --- forward(): pass-through of the parameter ---
    n = 256
    adj = (jax.random.uniform(key_a, (n, n), dtype=jnp.float32) > 0.7).astype(
        jnp.float32)
    fwd = estimate_adj_forward(adj)
    jax.block_until_ready(fwd)
    assert fwd.shape == (n, n) and bool(jnp.all(fwd == adj))

    # --- multi-tile, tile-aligned n (2x2 grids) ---
    for symmetric in (False, True):
        out = estimate_adj_normalize(adj, symmetric=symmetric,
                                     tiles=(128, 128, 128, 128))
        jax.block_until_ready(out)
        ref = _normalize_ref(adj, symmetric=symmetric)
        assert jnp.allclose(out, ref, atol=1e-5, rtol=1e-5), (
            f"normalize mismatch (symmetric={symmetric}, n={n})")

    # --- ragged n: exercises in-kernel edge-tile masking (no pad/slice) ---
    n2 = 200
    adj2 = (jax.random.uniform(key_b, (n2, n2), dtype=jnp.float32) > 0.7
            ).astype(jnp.float32)
    for symmetric in (False, True):
        for tiles in ((128, 128, 128, 128),
                      (128, 256, 128, 256),
                      (512, 2048, 512, 1024)):
            out = estimate_adj_normalize(adj2, symmetric=symmetric,
                                         tiles=tiles)
            jax.block_until_ready(out)
            ref = _normalize_ref(adj2, symmetric=symmetric)
            assert jnp.allclose(out, ref, atol=1e-5, rtol=1e-5), (
                f"normalize mismatch (symmetric={symmetric}, n={n2}, "
                f"tiles={tiles})")

    print("KERNEL_OK")
</pallas_src>

<mosaic_0001>
module attributes {stable_mosaic.version = 11 : i64} {
  func.func @_rowsum_colsum_kernel(%arg0: i32, %arg1: i32, %arg2: memref<128x128xf32, #tpu.memory_space<vmem>>, %arg3: memref<128x1xf32, #tpu.memory_space<vmem>>) attributes {dimension_semantics = [#tpu.dimension_semantics<parallel>, #tpu.dimension_semantics<arbitrary>], iteration_bounds = array<i64: 2, 2>, scalar_prefetch = 0 : i64, scratch_operands = 0 : i64, tpu.core_type = #tpu.core_type<tc>, window_params = [{transform_indices = @transform_0, window_bounds = array<i64: 128, 128>}, {transform_indices = @transform_1, window_bounds = array<i64: 128, 1>}]} {
    %c0 = arith.constant 0 : index
    %c0_0 = arith.constant 0 : index
    %0 = vector.load %arg2[%c0, %c0_0] : memref<128x128xf32, #tpu.memory_space<vmem>>, vector<128x128xf32>
    %c0_i32 = arith.constant 0 : i32
    %1 = arith.cmpi eq, %arg1, %c0_i32 : i32
    %2 = arith.extui %1 : i1 to i32
    %c0_i32_1 = arith.constant 0 : i32
    %3 = arith.cmpi ne, %2, %c0_i32_1 : i32
    scf.if %3 {
      %cst_6 = arith.constant 0.000000e+00 : f32
      %9 = vector.broadcast %cst_6 : f32 to vector<128x1xf32>
      %c0_7 = arith.constant 0 : index
      %c0_8 = arith.constant 0 : index
      %10 = vector.load %arg3[%c0_7, %c0_8] : memref<128x1xf32, #tpu.memory_space<vmem>>, vector<128x1xf32>
      tpu.vector_store %arg3[%c0_7, %c0_8], %9 {strides = array<i32>} : memref<128x1xf32, #tpu.memory_space<vmem>>, vector<128x1xf32>,
    } else {
    }
    %c0_2 = arith.constant 0 : index
    %c0_3 = arith.constant 0 : index
    %4 = vector.load %arg3[%c0_2, %c0_3] : memref<128x1xf32, #tpu.memory_space<vmem>>, vector<128x1xf32>
    %cst = arith.constant dense<0.000000e+00> : vector<128xf32>
    %5 = vector.multi_reduction <add>, %0, %cst [1] : vector<128x128xf32> to vector<128xf32>
    %6 = vector.shape_cast %5 : vector<128xf32> to vector<128x1xf32>
    %7 = arith.addf %4, %6 : vector<128x1xf32>
    %c0_4 = arith.constant 0 : index
    %c0_5 = arith.constant 0 : index
    %8 = vector.load %arg3[%c0_4, %c0_5] : memref<128x1xf32, #tpu.memory_space<vmem>>, vector<128x1xf32>
    tpu.vector_store %arg3[%c0_4, %c0_5], %7 {strides = array<i32>} : memref<128x1xf32, #tpu.memory_space<vmem>>, vector<128x1xf32>,
    return
  }
  func.func @transform_0(%arg0: i32, %arg1: i32) -> (i32, i32) {
    %c0_i32 = arith.constant 0 : i32
    return %arg0, %arg1 : i32, i32
  }
  func.func @transform_1(%arg0: i32, %arg1: i32) -> (i32, i32) {
    %c0_i32 = arith.constant 0 : i32
    %c0_i32_0 = arith.constant 0 : i32
    return %arg0, %c0_i32 : i32, i32
  }
}

</mosaic_0001>

<llo_original>
// kernel: tpu_custom_call.1
$region0: #{tpu_custom_call.1}
  #allocation0 [shape = 'u32[]', space=smem, size = 0x4, offset = 0x4, fixed_abs, tag = 'smem constant byte address 0x4 - core index']
  #allocation1 [shape = 'u32[144,128]{1,0:T(1,128)}', space=vmem, size = 0x12000, scoped, tag = 'internal scratch']
  %s0 = inlined_call_operand.hbm [shape: f32[256,256], index: 0, kind: input, shape index: {}]
  %s1 = inlined_call_operand.vmem [shape: f32[256,1], index: 1, kind: output, shape index: {}]
  %s2 = sld [smem:[#allocation0]]
  $region45: #{tpu_custom_call.1} parent=0
    _
  %s4 = ssub.s32 1, %s2
  %s5 = scalar_select 0, %s4, %s2
  $region1: #{tpu_custom_call.1} parent=0
    #allocation2 [shape = 'u8[131072]{0}', space=vmem, size = 0x20000, scoped, tag = 'input window, operand 0']
    #allocation3 [shape = 's32[2]{0}', space=sflag, size = 0x8, scoped, tag = 'scoped memory for tpu_custom_call.1']
    %6 = vsyncpa [#allocation3], 0
    %s7 = scalar_lea.sflag [#allocation3], 1
    %8 = vsyncpa %s7, 0
    loop: start=0, step=1, limit=6
    $region2: #{tpu_custom_call.1} parent=1 // loop_pre_header
      _
    $region3: #{tpu_custom_call.1} parent=1 // loop_header
      %s10 = sphi 0, %s14
      %p11 = scmp.ge.s32.totalorder %s10, 6
      %s17 = sphi 0, %s29
      %s18 = sphi 0, %s25
      %s19 = sphi 0, %s17
      %s20 = sphi 0, %s18
      %s21 = sphi 0, %s19
      %s22 = sphi 0, %s20
      %s34 = sphi 0, %s36
      %s37 = sphi 0, %s34
      %s38 = sphi 0, %s37
      %s54 = sphi 0, %s38
      %s60 = sphi 0, %s62
      %s63 = sphi 0, %s60
      %s64 = sphi 0, %s63
      %s80 = sphi 0, %s64
    $region4: #{tpu_custom_call.1} parent=1 // loop_header_branch
      %13 = sbr.rel (%p11) target = $region8
    $region5: #{tpu_custom_call.1} parent=1 // loop_body
      %s15 = ssub.s32 %s10, 1
      %s16 = ssub.s32 %s10, 2
      %s23 = sadd.s32 1, %s18
      %p24 = scmp.ge.s32.totalorder %s23, 2
      %s25 = scalar_select %p24, 0, %s23
      %s26 = sadd.s32 1, %s17
      %s27 = scalar_select %p24, %s26, %s17
      %p28 = scmp.ge.s32.totalorder %s27, 2
      %s29 = scalar_select %p28, 0, %s27
      %s30 = ssub.s32 %s17, %s29
      %s31 = ssub.s32 %s18, %s25
      %s32 = sor.u32 %s30, %s31
      %p33 = scmp.eq.s32.totalorder %s32, 0
      %s35 = sadd.s32 %s34, 1
      %s36 = scalar_select %p33, %s34, %s35
      %p39 = pneg %p33
      %p40 = scmp.eq.s32.totalorder %s10, 3
      %p41 = por %p39, %p40
      %p42 = scmp.ne.s32.totalorder %s34, %s37
      %p43 = scmp.eq.s32.totalorder %s10, 0
      %p44 = por %p42, %p43
      %p45 = scmp.ne.s32.totalorder %s34, %s37
      %p46 = scmp.eq.s32.totalorder %s15, 3
      %p47 = por %p45, %p46
      %p48 = scmp.ne.s32.totalorder %s37, %s38
      %p49 = scmp.eq.s32.totalorder %s15, 0
      %p50 = por %p48, %p49
      %p51 = scmp.ne.s32.totalorder %s37, %s38
      %p52 = scmp.eq.s32.totalorder %s16, 3
      %p53 = por %p51, %p52
      %p55 = scmp.ne.s32.totalorder %s38, %s54
      %p56 = scmp.eq.s32.totalorder %s16, 0
      %p57 = por %p55, %p56
      %s58 = ssub.s32 %s17, %s29
      %p59 = scmp.eq.s32.totalorder %s58, 0
      %s61 = sadd.s32 %s60, 1
      %s62 = scalar_select %p59, %s60, %s61
      %p65 = pneg %p59
      %p66 = scmp.eq.s32.totalorder %s10, 3
      %p67 = por %p65, %p66
      %p68 = scmp.ne.s32.totalorder %s60, %s63
      %p69 = scmp.eq.s32.totalorder %s10, 0
      %p70 = por %p68, %p69
      %p71 = scmp.ne.s32.totalorder %s60, %s63
      %p72 = scmp.eq.s32.totalorder %s15, 3
      %p73 = por %p71, %p72
      %p74 = scmp.ne.s32.totalorder %s63, %s64
      %p75 = scmp.eq.s32.totalorder %s15, 0
      %p76 = por %p74, %p75
      %p77 = scmp.ne.s32.totalorder %s63, %s64
      %p78 = scmp.eq.s32.totalorder %s16, 3
      %p79 = por %p77, %p78
      %p81 = scmp.ne.s32.totalorder %s64, %s80
      %p82 = scmp.eq.s32.totalorder %s16, 0
      %p83 = por %p81, %p82
      %p84 = scmp.le.s32.totalorder 1, %s10
      %p85 = scmp.lt.s32.totalorder %s10, 5
      %p86 = pnand %p84, %p85
      %p87 = pneg %p86
      // Predicated region
      $region9: #{tpu_custom_call.1} parent=5 // pred_check
        _
      $region10: #{tpu_custom_call.1} parent=5 // pred_check_branch
        %89 = sbr.rel (%p86) target = $region12
      $region11: #{tpu_custom_call.1} parent=5 // pred_region
        %s90 = ssub.s32 %s10, 1
      $region12: #{tpu_custom_call.1} parent=5 // pred_fallthru
        _
      %p91 = scmp.lt.s32.totalorder %s10, 4
      // Predicated region
      $region13: #{tpu_custom_call.1} parent=5 // pred_check
        %p92 = pneg %p91
      $region14: #{tpu_custom_call.1} parent=5 // pred_check_branch
        %94 = sbr.rel (%p92) target = $region16
      $region15: #{tpu_custom_call.1} parent=5 // pred_region
        // Predicated region
        $region17: #{tpu_custom_call.1} parent=15 // pred_check
          %p95 = pneg %p44
        $region18: #{tpu_custom_call.1} parent=15 // pred_check_branch
          %97 = sbr.rel (%p95) target = $region20
        $region19: #{tpu_custom_call.1} parent=15 // pred_region
          %s98 = sand.u32 %s34, 1
          %s99 = scalar_lea.sflag [#allocation3], %s98
          %s100 = sand.u32 %s34, 1
          %s101 = smul.addr %s100, 128
          %s102 = scalar_lea.vmem [#allocation2], %s101
          %s103 = smul.u32 16, %s17
          %s105 = ssub.s32 2048, 2048
          %106 = vsyncadd %s99, %s105
          %s107 = smul.addr %s103, 2
          %s108 = sadd.s32 %s18, %s107
          %s109 = smul.addr %s108, 128
          %s110 = scalar_lea.hbm %s0, %s109
          %s111 = sshll.u32 %s102, 4
          %s112 = int_to_ptr.vmem [resolvable:$true] %s111
          %117 = dma.hbm_to_vmem [thread:$0]  %s110, 2048, %s112, %s99, 256, 128, 8
        $region20: #{tpu_custom_call.1} parent=15 // pred_fallthru
          _
      $region16: #{tpu_custom_call.1} parent=5 // pred_fallthru
        _
      %p118 = scmp.le.s32.totalorder 1, %s10
      %p119 = scmp.lt.s32.totalorder %s10, 5
      %p120 = pnand %p118, %p119
      %p121 = pneg %p120
      // Predicated region
      $region21: #{tpu_custom_call.1} parent=5 // pred_check
        _
      $region22: #{tpu_custom_call.1} parent=5 // pred_check_branch
        %123 = sbr.rel (%p120) target = $region24
      $region23: #{tpu_custom_call.1} parent=5 // pred_region
        %s124 = ssub.s32 %s10, 1
        %s125 = sand.u32 %s37, 1
        %s126 = scalar_lea.sflag [#allocation3], %s125
        %s127 = sand.u32 %s37, 1
        %s128 = smul.addr %s127, 128
        %s129 = scalar_lea.vmem [#allocation2], %s128
        // Predicated region
        $region25: #{tpu_custom_call.1} parent=23 // pred_check
          %p130 = pneg %p50
        $region26: #{tpu_custom_call.1} parent=23 // pred_check_branch
          %132 = sbr.rel (%p130) target = $region28
        $region27: #{tpu_custom_call.1} parent=23 // pred_region
          %133 = dma.done %s126, 2048
        $region28: #{tpu_custom_call.1} parent=23 // pred_fallthru
          _
        %s134 = sand.u32 %s37, 1
        %s135 = scalar_lea.sflag [#allocation3], %s134
        %s136 = sand.u32 %s37, 1
        %s137 = smul.addr %s136, 128
        %s138 = scalar_lea.vmem [#allocation2], %s137
        %p139 = pneg %p50
        %p140 = pneg %p47
        %p141 = pneg %p76
        %p142 = pneg %p73
        %s143 = smul.u32 16, %s19
        %p144 = scmp.lt.s32.totalorder %s143, 31
        %s145 = scalar_select %p144, %s143, 31
        %s146 = smul.addr %s145, 8
        %s147 = scalar_lea.vmem %s1, %s146
        %s148 = smul.u32 16, %s19
        %s149 = smul.u32 16, %s19
        %p150 = scmp.lt.s32.totalorder %s149, 31
        %s151 = scalar_select %p150, %s149, 31
        %s152 = smul.addr %s151, 8
        %s153 = scalar_lea.vmem %s1, %s152
        %s154 = smul.u32 16, %s19
        %v155 = vld [vmem:[%s129] sm:$0xff]
        %v156 = vld [vmem:[%s129 + $0x8] sm:$0xff]
        %v157 = vld [vmem:[%s129 + $0x10] sm:$0xff]
        %v158 = vld [vmem:[%s129 + $0x18] sm:$0xff]
        %v159 = vld [vmem:[%s129 + $0x20] sm:$0xff]
        %v160 = vld [vmem:[%s129 + $0x28] sm:$0xff]
        %v161 = vld [vmem:[%s129 + $0x30] sm:$0xff]
        %v162 = vld [vmem:[%s129 + $0x38] sm:$0xff]
        %v163 = vld [vmem:[%s129 + $0x40] sm:$0xff]
        %v164 = vld [vmem:[%s129 + $0x48] sm:$0xff]
        %v165 = vld [vmem:[%s129 + $0x50] sm:$0xff]
        %v166 = vld [vmem:[%s129 + $0x58] sm:$0xff]
        %v167 = vld [vmem:[%s129 + $0x60] sm:$0xff]
        %v168 = vld [vmem:[%s129 + $0x68] sm:$0xff]
        %v169 = vld [vmem:[%s129 + $0x70] sm:$0xff]
        %v170 = vld [vmem:[%s129 + $0x78] sm:$0xff]
        %p171 = scmp.eq.s32.totalorder %s20, 0
        // Predicated region
        $region29: #{tpu_custom_call.1} parent=23 // pred_check
          %p172 = pneg %p171
        $region30: #{tpu_custom_call.1} parent=23 // pred_check_branch
          %174 = sbr.rel (%p172) target = $region32
        $region31: #{tpu_custom_call.1} parent=23 // pred_region
          %vm175 = vcmask 7168
          %176 = vst.msk [vmem:[%s153] sm:$0xff] %vm175, 0.0
          %177 = vst.msk [vmem:[%s153 + $0x8] sm:$0xff] %vm175, 0.0
          %178 = vst.msk [vmem:[%s153 + $0x10] sm:$0xff] %vm175, 0.0
          %179 = vst.msk [vmem:[%s153 + $0x18] sm:$0xff] %vm175, 0.0
          %180 = vst.msk [vmem:[%s153 + $0x20] sm:$0xff] %vm175, 0.0
          %181 = vst.msk [vmem:[%s153 + $0x28] sm:$0xff] %vm175, 0.0
          %182 = vst.msk [vmem:[%s153 + $0x30] sm:$0xff] %vm175, 0.0
          %183 = vst.msk [vmem:[%s153 + $0x38] sm:$0xff] %vm175, 0.0
          %184 = vst.msk [vmem:[%s153 + $0x40] sm:$0xff] %vm175, 0.0
          %185 = vst.msk [vmem:[%s153 + $0x48] sm:$0xff] %vm175, 0.0
          %186 = vst.msk [vmem:[%s153 + $0x50] sm:$0xff] %vm175, 0.0
          %187 = vst.msk [vmem:[%s153 + $0x58] sm:$0xff] %vm175, 0.0
          %188 = vst.msk [vmem:[%s153 + $0x60] sm:$0xff] %vm175, 0.0
          %189 = vst.msk [vmem:[%s153 + $0x68] sm:$0xff] %vm175, 0.0
          %190 = vst.msk [vmem:[%s153 + $0x70] sm:$0xff] %vm175, 0.0
          %191 = vst.msk [vmem:[%s153 + $0x78] sm:$0xff] %vm175, 0.0
        $region32: #{tpu_custom_call.1} parent=23 // pred_fallthru
          _
        %v192 = vld [vmem:[%s153] sm:$0xff]
        %v193 = vld [vmem:[%s153 + $0x8] sm:$0xff]
        %v194 = vld [vmem:[%s153 + $0x10] sm:$0xff]
        %v195 = vld [vmem:[%s153 + $0x18] sm:$0xff]
        %v196 = vld [vmem:[%s153 + $0x20] sm:$0xff]
        %v197 = vld [vmem:[%s153 + $0x28] sm:$0xff]
        %v198 = vld [vmem:[%s153 + $0x30] sm:$0xff]
        %v199 = vld [vmem:[%s153 + $0x38] sm:$0xff]
        %v200 = vld [vmem:[%s153 + $0x40] sm:$0xff]
        %v201 = vld [vmem:[%s153 + $0x48] sm:$0xff]
        %v202 = vld [vmem:[%s153 + $0x50] sm:$0xff]
        %v203 = vld [vmem:[%s153 + $0x58] sm:$0xff]
        %v204 = vld [vmem:[%s153 + $0x60] sm:$0xff]
        %v205 = vld [vmem:[%s153 + $0x68] sm:$0xff]
        %v206 = vld [vmem:[%s153 + $0x70] sm:$0xff]
        %v207 = vld [vmem:[%s153 + $0x78] sm:$0xff]
        %208 = vadd.xlane.f32.xlu0 %v155
        %v209 = vpop.xlane.xlu0 %208
        %210 = vadd.xlane.f32.xlu0 %v156
        %v211 = vpop.xlane.xlu0 %210
        %212 = vadd.xlane.f32.xlu0 %v157
        %v213 = vpop.xlane.xlu0 %212
        %214 = vadd.xlane.f32.xlu0 %v158
        %v215 = vpop.xlane.xlu0 %214
        %216 = vadd.xlane.f32.xlu0 %v159
        %v217 = vpop.xlane.xlu0 %216
        %218 = vadd.xlane.f32.xlu0 %v160
        %v219 = vpop.xlane.xlu0 %218
        %220 = vadd.xlane.f32.xlu0 %v161
        %v221 = vpop.xlane.xlu0 %220
        %222 = vadd.xlane.f32.xlu0 %v162
        %v223 = vpop.xlane.xlu0 %222
        %224 = vadd.xlane.f32.xlu0 %v163
        %v225 = vpop.xlane.xlu0 %224
        %226 = vadd.xlane.f32.xlu0 %v164
        %v227 = vpop.xlane.xlu0 %226
        %228 = vadd.xlane.f32.xlu0 %v165
        %v229 = vpop.xlane.xlu0 %228
        %230 = vadd.xlane.f32.xlu0 %v166
        %v231 = vpop.xlane.xlu0 %230
        %232 = vadd.xlane.f32.xlu0 %v167
        %v233 = vpop.xlane.xlu0 %232
        %234 = vadd.xlane.f32.xlu0 %v168
        %v235 = vpop.xlane.xlu0 %234
        %236 = vadd.xlane.f32.xlu0 %v169
        %v237 = vpop.xlane.xlu0 %236
        %238 = vadd.xlane.f32.xlu0 %v170
        %v239 = vpop.xlane.xlu0 %238
        %v240 = vadd.f32 %v192, %v209
        %v241 = vadd.f32 %v193, %v211
        %v242 = vadd.f32 %v194, %v213
        %v243 = vadd.f32 %v195, %v215
        %v244 = vadd.f32 %v196, %v217
        %v245 = vadd.f32 %v197, %v219
        %v246 = vadd.f32 %v198, %v221
        %v247 = vadd.f32 %v199, %v223
        %v248 = vadd.f32 %v200, %v225
        %v249 = vadd.f32 %v201, %v227
        %v250 = vadd.f32 %v202, %v229
        %v251 = vadd.f32 %v203, %v231
        %v252 = vadd.f32 %v204, %v233
        %v253 = vadd.f32 %v205, %v235
        %v254 = vadd.f32 %v206, %v237
        %v255 = vadd.f32 %v207, %v239
        %vm256 = vcmask 7168
        %257 = vst.msk [vmem:[%s153] sm:$0xff] %vm256, %v240
        %258 = vst.msk [vmem:[%s153 + $0x8] sm:$0xff] %vm256, %v241
        %259 = vst.msk [vmem:[%s153 + $0x10] sm:$0xff] %vm256, %v242
        %260 = vst.msk [vmem:[%s153 + $0x18] sm:$0xff] %vm256, %v243
        %261 = vst.msk [vmem:[%s153 + $0x20] sm:$0xff] %vm256, %v244
        %262 = vst.msk [vmem:[%s153 + $0x28] sm:$0xff] %vm256, %v245
        %263 = vst.msk [vmem:[%s153 + $0x30] sm:$0xff] %vm256, %v246
        %264 = vst.msk [vmem:[%s153 + $0x38] sm:$0xff] %vm256, %v247
        %265 = vst.msk [vmem:[%s153 + $0x40] sm:$0xff] %vm256, %v248
        %266 = vst.msk [vmem:[%s153 + $0x48] sm:$0xff] %vm256, %v249
        %267 = vst.msk [vmem:[%s153 + $0x50] sm:$0xff] %vm256, %v250
        %268 = vst.msk [vmem:[%s153 + $0x58] sm:$0xff] %vm256, %v251
        %269 = vst.msk [vmem:[%s153 + $0x60] sm:$0xff] %vm256, %v252
        %270 = vst.msk [vmem:[%s153 + $0x68] sm:$0xff] %vm256, %v253
        %271 = vst.msk [vmem:[%s153 + $0x70] sm:$0xff] %vm256, %v254
        %272 = vst.msk [vmem:[%s153 + $0x78] sm:$0xff] %vm256, %v255
        %s273 = smul.u32 16, %s19
        %p274 = scmp.lt.s32.totalorder %s273, 31
        %s275 = scalar_select %p274, %s273, 31
        %s276 = smul.addr %s275, 8
        %s277 = scalar_lea.vmem %s1, %s276
        // Predicated region
        $region33: #{tpu_custom_call.1} parent=23 // pred_check
          %p278 = pneg %p73
        $region34: #{tpu_custom_call.1} parent=23 // pred_check_branch
          %280 = sbr.rel (%p278) target = $region36
        $region35: #{tpu_custom_call.1} parent=23 // pred_region
          %s281 = smul.u32 16, %s19
        $region36: #{tpu_custom_call.1} parent=23 // pred_fallthru
          _
      $region24: #{tpu_custom_call.1} parent=5 // pred_fallthru
        _
      %p282 = scmp.le.s32.totalorder 2, %s10
      // Predicated region
      $region37: #{tpu_custom_call.1} parent=5 // pred_check
        %p283 = pneg %p282
      $region38: #{tpu_custom_call.1} parent=5 // pred_check_branch
        %285 = sbr.rel (%p283) target = $region40
      $region39: #{tpu_custom_call.1} parent=5 // pred_region
        %s286 = ssub.s32 %s10, 2
        // Predicated region
        $region41: #{tpu_custom_call.1} parent=39 // pred_check
          %p287 = pneg %p79
        $region42: #{tpu_custom_call.1} parent=39 // pred_check_branch
          %289 = sbr.rel (%p287) target = $region44
        $region43: #{tpu_custom_call.1} parent=39 // pred_region
          %s290 = smul.u32 16, %s21
          %p291 = scmp.lt.s32.totalorder %s290, 31
          %s292 = scalar_select %p291, %s290, 31
          %s293 = smul.addr %s292, 8
          %s294 = scalar_lea.vmem %s1, %s293
        $region44: #{tpu_custom_call.1} parent=39 // pred_fallthru
          _
      $region40: #{tpu_custom_call.1} parent=5 // pred_fallthru
        _
    $region6: #{tpu_custom_call.1} parent=1 // loop_footer
      %s14 = sadd.s32 1, %s10
    $region7: #{tpu_custom_call.1} parent=1 // loop_footer_branch
      %9 = sbr.rel target = $region3
    $region8: #{tpu_custom_call.1} parent=1 // loop_exit
      _
    %295 = vsyncpa [#allocation3], 1
    %s296 = scalar_lea.sflag [#allocation3], 1
    %297 = vsyncpa %s296, 1

</llo_original>
